<compile_context>
chip_gen: v7x
topology: tpu7x:2x2x1
jax: 0.10.0
libtpu: 0.0.40
codegen_flags: <defaults>
</compile_context>

<pallas_src>
import math

import jax
import jax.numpy as jnp
from jax.experimental import pallas as pl
from jax.experimental.pallas import tpu as pltpu


def _vmem_limit_bytes():
    """~80% of physical VMEM: leaves headroom for compiler-internal scratch.

    ~51 MiB on v7x (64 MiB/TC), ~102 MiB on v5e/v6e (128 MiB)."""
    try:
        cap = getattr(pltpu.get_tpu_info(), "vmem_capacity_bytes", None)
    except Exception:
        cap = None
    if cap is None:
        return None
    return int(cap * 0.8)


def _pick_tile(n, pref=256):
    """Largest tile <= pref that divides n; falls back to the full extent so every
    block either divides the (8/16/32, 128) layout tile or equals the array dim."""
    if n <= pref:
        return n
    for t in (pref, 256, 128):
        if t <= pref and n % t == 0:
            return t
    return n


def _make_qkv_kernel(n_heads, d_k, d_model, scale):
    def kernel(x_ref, wqkv_ref, bqkv_ref, q_ref, k_ref, v_ref):
        xb = x_ref[0].astype(jnp.bfloat16)                              # (ts, D)
        qkv = jnp.dot(xb, wqkv_ref[...],
                      preferred_element_type=jnp.float32) + bqkv_ref[...]  # (ts, 3D) f32
        # Split into head-major bf16 outputs once (hot attention kernel needs no re-layout).
        for h in range(n_heads):
            lo = h * d_k
            q_ref[0, h] = (qkv[:, lo:lo + d_k] * scale).astype(jnp.bfloat16)
            k_ref[0, h] = qkv[:, d_model + lo:d_model + lo + d_k].astype(jnp.bfloat16)
            v_ref[0, h] = qkv[:, 2 * d_model + lo:2 * d_model + lo + d_k].astype(jnp.bfloat16)
    return kernel


def _make_attn_ffn_kernel(n_heads, eps):
    def kernel(x_ref, mask_ref, q_ref, k_ref, v_ref,
               wo_ref, bo_ref, g1_ref, be1_ref,
               w1_ref, b1_ref, w2_ref, b2_ref, g2_ref, be2_ref,
               out_ref, attnw_ref):
        qh = q_ref[0]                                # (H, tq, dk) bf16, pre-scaled by 1/sqrt(dk)
        kh = k_ref[0]                                # (H, S,  dk) bf16
        vh = v_ref[0]                                # (H, S,  dk) bf16

        # --- scaled dot-product attention, all heads batched on the MXU ---
        scores = jnp.einsum('hqd,hkd->hqk', qh, kh,
                            preferred_element_type=jnp.float32)          # (H, tq, S) f32
        masked = (mask_ref[0] > 0)[None, :, :]                           # (1, tq, S) bool
        scores = jnp.where(masked, jnp.float32(-1e9), scores)
        m = jnp.max(scores, axis=-1, keepdims=True)
        p = jnp.exp(scores - m)
        inv = 1.0 / jnp.sum(p, axis=-1, keepdims=True)                   # exact recip (torch parity)
        probs = p * inv
        attnw_ref[0] = probs.astype(attnw_ref.dtype)                     # contiguous (H, tq, S) store

        ctx = jnp.einsum('hqk,hkd->hqd', probs.astype(jnp.bfloat16), vh,
                         preferred_element_type=jnp.float32)             # (H, tq, dk)
        attn = jnp.concatenate([ctx[h] for h in range(n_heads)], axis=-1)  # (tq, D)

        # --- output projection + residual + LayerNorm 1 (two-pass variance) ---
        x_f32 = x_ref[0]                                                 # (tq, D) f32
        attn_out = jnp.dot(attn.astype(jnp.bfloat16), wo_ref[...],
                           preferred_element_type=jnp.float32) + bo_ref[...]
        y = x_f32 + attn_out
        mu = jnp.mean(y, axis=-1, keepdims=True)
        yc = y - mu
        var = jnp.mean(yc * yc, axis=-1, keepdims=True)
        y_ln = yc * jax.lax.rsqrt(var + eps) * g1_ref[...] + be1_ref[...]

        # --- position-wise FFN (bf16 MXU) ---
        h1 = jnp.dot(y_ln.astype(jnp.bfloat16), w1_ref[...],
                     preferred_element_type=jnp.float32) + b1_ref[...]
        h1 = jnp.maximum(h1, 0.0)
        h2 = jnp.dot(h1.astype(jnp.bfloat16), w2_ref[...],
                     preferred_element_type=jnp.float32) + b2_ref[...]

        # --- residual + LayerNorm 2 ---
        z = y_ln + h2
        mu2 = jnp.mean(z, axis=-1, keepdims=True)
        zc = z - mu2
        var2 = jnp.mean(zc * zc, axis=-1, keepdims=True)
        out_ref[0] = zc * jax.lax.rsqrt(var2 + eps) * g2_ref[...] + be2_ref[...]
    return kernel


def encoder_layer(x, attn_mask, params, *, n_heads, attn_weights_dtype=jnp.float32):
    """x: (B, S, D) f32; attn_mask: (B, S, S) bool/int (nonzero = masked position)."""
    B, S, D = x.shape
    assert D % n_heads == 0
    d_k = D // n_heads
    d_ff = params["w1"].shape[1]
    eps = 1e-6                      # matches nn.LayerNorm(eps=1e-06)
    scale = 1.0 / math.sqrt(d_k)
    bf16 = jnp.bfloat16

    mask_i8 = attn_mask.astype(jnp.int8)
    wqkv = jnp.concatenate([params["wq"], params["wk"], params["wv"]], axis=1).astype(bf16)
    bqkv = jnp.concatenate([params["bq"], params["bk"], params["bv"]], axis=1)

    vmem = _vmem_limit_bytes()

    def cparams(sem):
        return pltpu.CompilerParams(dimension_semantics=sem, vmem_limit_bytes=vmem)

    def const(shape):
        # Constant-index weight spec: never re-DMA'd, single-buffered (halves weight VMEM).
        return pl.BlockSpec(shape, lambda b, t: (0,) * len(shape),
                            pipeline_mode=pl.Buffered(1))

    # ---------------- Kernel A: fused QKV projection ----------------
    # TODO(synk): when S is tiny, fold several batch rows into one step so the MXU
    # M dimension reaches ~256 rows on v6e/v7x.
    ts = _pick_tile(S, 256)
    qkv_fn = pl.pallas_call(
        _make_qkv_kernel(n_heads, d_k, D, scale),
        out_shape=tuple(jax.ShapeDtypeStruct((B, n_heads, S, d_k), bf16) for _ in range(3)),
        grid_spec=pltpu.PrefetchScalarGridSpec(
            num_scalar_prefetch=0,
            grid=(B, S // ts),
            in_specs=[
                pl.BlockSpec((1, ts, D), lambda b, t: (b, t, 0)),   # x row tile
                const((D, 3 * D)),                                  # WQ|WK|WV  (bf16)
                const((1, 3 * D)),                                  # bQ|bK|bV
            ],
            out_specs=tuple(
                pl.BlockSpec((1, n_heads, ts, d_k), lambda b, t: (b, 0, t, 0))
                for _ in range(3)),
        ),
        compiler_params=cparams(("parallel", "parallel")),
    )
    q, k, v = qkv_fn(x, wqkv, bqkv)

    # -------- Kernel B: attention + out-proj + LN1 + FFN + LN2, query-tiled --------
    tq = _pick_tile(S, 256)
    attn_fn = pl.pallas_call(
        _make_attn_ffn_kernel(n_heads, eps),
        out_shape=(
            jax.ShapeDtypeStruct((B, S, D), jnp.float32),
            jax.ShapeDtypeStruct((B, n_heads, S, S), attn_weights_dtype),
        ),
        grid_spec=pltpu.PrefetchScalarGridSpec(
            num_scalar_prefetch=0,
            grid=(B, S // tq),
            in_specs=[
                pl.BlockSpec((1, tq, D), lambda b, t: (b, t, 0)),              # x (residual)
                pl.BlockSpec((1, tq, S), lambda b, t: (b, t, 0)),              # mask (int8)
                pl.BlockSpec((1, n_heads, tq, d_k), lambda b, t: (b, 0, t, 0)),  # q tile
                pl.BlockSpec((1, n_heads, S, d_k), lambda b, t: (b, 0, 0, 0)),   # k (full seq)
                pl.BlockSpec((1, n_heads, S, d_k), lambda b, t: (b, 0, 0, 0)),   # v (full seq)
                const((D, D)), const((1, D)),        # WO, bO
                const((1, D)), const((1, D)),        # gamma1, beta1
                const((D, d_ff)), const((1, d_ff)),  # W1, b1
                const((d_ff, D)), const((1, D)),     # W2, b2
                const((1, D)), const((1, D)),        # gamma2, beta2
            ],
            out_specs=[
                pl.BlockSpec((1, tq, D), lambda b, t: (b, t, 0)),
                pl.BlockSpec((1, n_heads, tq, S), lambda b, t: (b, 0, t, 0)),
            ],
        ),
        compiler_params=cparams(("parallel", "parallel")),
    )
    out, attnw = attn_fn(
        x, mask_i8, q, k, v,
        params["wo"].astype(bf16), params["bo"],
        params["g1"], params["be1"],
        params["w1"].astype(bf16), params["b1"],
        params["w2"].astype(bf16), params["b2"],
        params["g2"], params["be2"],
    )
    return out, attnw


def init_params(key, d_model, n_heads, d_ff):
    ks = jax.random.split(key, 6)
    s = 0.02
    return {
        "wq": jax.random.normal(ks[0], (d_model, d_model), jnp.float32) * s,
        "bq": jnp.zeros((1, d_model), jnp.float32),
        "wk": jax.random.normal(ks[1], (d_model, d_model), jnp.float32) * s,
        "bk": jnp.zeros((1, d_model), jnp.float32),
        "wv": jax.random.normal(ks[2], (d_model, d_model), jnp.float32) * s,
        "bv": jnp.zeros((1, d_model), jnp.float32),
        "wo": jax.random.normal(ks[3], (d_model, d_model), jnp.float32) * s,
        "bo": jnp.zeros((1, d_model), jnp.float32),
        "g1": jnp.ones((1, d_model), jnp.float32),
        "be1": jnp.zeros((1, d_model), jnp.float32),
        "w1": jax.random.normal(ks[4], (d_model, d_ff), jnp.float32) * s,
        "b1": jnp.zeros((1, d_ff), jnp.float32),
        "w2": jax.random.normal(ks[5], (d_ff, d_model), jnp.float32) * s,
        "b2": jnp.zeros((1, d_model), jnp.float32),
        "g2": jnp.ones((1, d_model), jnp.float32),
        "be2": jnp.zeros((1, d_model), jnp.float32),
    }


if __name__ == "__main__":
    B, S, d_model, n_heads, d_ff = 2, 16, 128, 4, 256
    key = jax.random.PRNGKey(0)
    kx, km, kp = jax.random.split(key, 3)

    x = jax.random.normal(kx, (B, S, d_model), jnp.float32)
    # True = "masked out" (matches torch masked_fill_ semantics)
    attn_mask = jax.random.uniform(km, (B, S, S)) < 0.2
    params = init_params(kp, d_model, n_heads, d_ff)

    # TODO(synk): dropout1/dropout2 are identity (inference); training-mode dropout
    # would need in-kernel pltpu.prng_seed/prng_random_bits.
    out, attn_weights = encoder_layer(x, attn_mask, params, n_heads=n_heads)
    jax.block_until_ready(out)
    jax.block_until_ready(attn_weights)

    assert out.shape == (B, S, d_model)
    assert attn_weights.shape == (B, n_heads, S, S)
    assert bool(jnp.all(jnp.isfinite(out)))
    assert bool(jnp.all(jnp.isfinite(attn_weights)))
    # softmax rows must sum to 1 (exact reciprocal path for stored weights)
    row_sums = jnp.sum(attn_weights, axis=-1)
    assert bool(jnp.all(jnp.abs(row_sums - 1.0) < 1e-3))
    print("KERNEL_OK")
</pallas_src>

<mosaic_0001>
module attributes {stable_mosaic.version = 11 : i64} {
  func.func @kernel(%arg0: i32, %arg1: i32, %arg2: memref<1x16x128xf32, #tpu.memory_space<vmem>>, %arg3: memref<128x384xbf16, #tpu.memory_space<vmem>>, %arg4: memref<1x384xf32, #tpu.memory_space<vmem>>, %arg5: memref<1x4x16x32xbf16, #tpu.memory_space<vmem>>, %arg6: memref<1x4x16x32xbf16, #tpu.memory_space<vmem>>, %arg7: memref<1x4x16x32xbf16, #tpu.memory_space<vmem>>) attributes {dimension_semantics = [#tpu.dimension_semantics<parallel>, #tpu.dimension_semantics<parallel>], iteration_bounds = array<i64: 2, 1>, scalar_prefetch = 0 : i64, scratch_operands = 0 : i64, tpu.core_type = #tpu.core_type<tc>, window_params = [{transform_indices = @transform_0, window_bounds = array<i64: 1, 16, 128>}, {pipeline_mode = #tpu.pipeline_mode<synchronous>, transform_indices = @transform_1, window_bounds = array<i64: 128, 384>}, {pipeline_mode = #tpu.pipeline_mode<synchronous>, transform_indices = @transform_2, window_bounds = array<i64: 1, 384>}, {transform_indices = @transform_3, window_bounds = array<i64: 1, 4, 16, 32>}, {transform_indices = @transform_4, window_bounds = array<i64: 1, 4, 16, 32>}, {transform_indices = @transform_5, window_bounds = array<i64: 1, 4, 16, 32>}]} {
    %c0 = arith.constant 0 : index
    %c0_0 = arith.constant 0 : index
    %c0_1 = arith.constant 0 : index
    %0 = vector.load %arg2[%c0, %c0_0, %c0_1] : memref<1x16x128xf32, #tpu.memory_space<vmem>>, vector<1x16x128xf32>
    %1 = vector.shape_cast %0 : vector<1x16x128xf32> to vector<16x128xf32>
    %2 = arith.truncf %1 : vector<16x128xf32> to vector<16x128xbf16>
    %c0_2 = arith.constant 0 : index
    %c0_3 = arith.constant 0 : index
    %3 = vector.load %arg3[%c0_2, %c0_3] : memref<128x384xbf16, #tpu.memory_space<vmem>>, vector<128x384xbf16>
    %cst = arith.constant dense<0.000000e+00> : vector<16x384xf32>
    %4 = tpu.matmul %2, %3, %cst {dimension_numbers = #tpu.dot_dimension_numbers<[1], [0], [0], [1], [0, 0, 1, 1], [], []>} : vector<16x128xbf16>, vector<128x384xbf16>, vector<16x384xf32> -> vector<16x384xf32>
    %c0_4 = arith.constant 0 : index
    %c0_5 = arith.constant 0 : index
    %5 = vector.load %arg4[%c0_4, %c0_5] : memref<1x384xf32, #tpu.memory_space<vmem>>, vector<1x384xf32>
    %6 = vector.broadcast %5 : vector<1x384xf32> to vector<16x384xf32>
    %7 = arith.addf %4, %6 : vector<16x384xf32>
    %8 = vector.extract_strided_slice %7 {offsets = [0, 0], sizes = [16, 32], strides = [1, 1]} : vector<16x384xf32> to vector<16x32xf32>
    %cst_6 = arith.constant 0.176776692 : f32
    %9 = vector.broadcast %cst_6 : f32 to vector<16x32xf32>
    %10 = arith.mulf %8, %9 : vector<16x32xf32>
    %11 = arith.truncf %10 : vector<16x32xf32> to vector<16x32xbf16>
    %c0_7 = arith.constant 0 : index
    %c0_8 = arith.constant 0 : index
    %c0_9 = arith.constant 0 : index
    %c0_10 = arith.constant 0 : index
    %12 = vector.load %arg5[%c0_7, %c0_8, %c0_9, %c0_10] : memref<1x4x16x32xbf16, #tpu.memory_space<vmem>>, vector<1x1x16x32xbf16>
    %13 = vector.shape_cast %12 : vector<1x1x16x32xbf16> to vector<16x32xbf16>
    %14 = vector.shape_cast %11 : vector<16x32xbf16> to vector<1x1x16x32xbf16>
    tpu.vector_store %arg5[%c0_7, %c0_8, %c0_9, %c0_10], %14 {strides = array<i32>} : memref<1x4x16x32xbf16, #tpu.memory_space<vmem>>, vector<1x1x16x32xbf16>,
    %15 = vector.extract_strided_slice %7 {offsets = [0, 128], sizes = [16, 32], strides = [1, 1]} : vector<16x384xf32> to vector<16x32xf32>
    %16 = arith.truncf %15 : vector<16x32xf32> to vector<16x32xbf16>
    %c0_11 = arith.constant 0 : index
    %c0_12 = arith.constant 0 : index
    %c0_13 = arith.constant 0 : index
    %c0_14 = arith.constant 0 : index
    %17 = vector.load %arg6[%c0_11, %c0_12, %c0_13, %c0_14] : memref<1x4x16x32xbf16, #tpu.memory_space<vmem>>, vector<1x1x16x32xbf16>
    %18 = vector.shape_cast %17 : vector<1x1x16x32xbf16> to vector<16x32xbf16>
    %19 = vector.shape_cast %16 : vector<16x32xbf16> to vector<1x1x16x32xbf16>
    tpu.vector_store %arg6[%c0_11, %c0_12, %c0_13, %c0_14], %19 {strides = array<i32>} : memref<1x4x16x32xbf16, #tpu.memory_space<vmem>>, vector<1x1x16x32xbf16>,
    %20 = vector.extract_strided_slice %7 {offsets = [0, 256], sizes = [16, 32], strides = [1, 1]} : vector<16x384xf32> to vector<16x32xf32>
    %21 = arith.truncf %20 : vector<16x32xf32> to vector<16x32xbf16>
    %c0_15 = arith.constant 0 : index
    %c0_16 = arith.constant 0 : index
    %c0_17 = arith.constant 0 : index
    %c0_18 = arith.constant 0 : index
    %22 = vector.load %arg7[%c0_15, %c0_16, %c0_17, %c0_18] : memref<1x4x16x32xbf16, #tpu.memory_space<vmem>>, vector<1x1x16x32xbf16>
    %23 = vector.shape_cast %22 : vector<1x1x16x32xbf16> to vector<16x32xbf16>
    %24 = vector.shape_cast %21 : vector<16x32xbf16> to vector<1x1x16x32xbf16>
    tpu.vector_store %arg7[%c0_15, %c0_16, %c0_17, %c0_18], %24 {strides = array<i32>} : memref<1x4x16x32xbf16, #tpu.memory_space<vmem>>, vector<1x1x16x32xbf16>,
    %25 = vector.extract_strided_slice %7 {offsets = [0, 32], sizes = [16, 32], strides = [1, 1]} : vector<16x384xf32> to vector<16x32xf32>
    %cst_19 = arith.constant 0.176776692 : f32
    %26 = vector.broadcast %cst_19 : f32 to vector<16x32xf32>
    %27 = arith.mulf %25, %26 : vector<16x32xf32>
    %28 = arith.truncf %27 : vector<16x32xf32> to vector<16x32xbf16>
    %c0_20 = arith.constant 0 : index
    %c1 = arith.constant 1 : index
    %c0_21 = arith.constant 0 : index
    %c0_22 = arith.constant 0 : index
    %29 = vector.load %arg5[%c0_20, %c1, %c0_21, %c0_22] : memref<1x4x16x32xbf16, #tpu.memory_space<vmem>>, vector<1x1x16x32xbf16>
    %30 = vector.shape_cast %29 : vector<1x1x16x32xbf16> to vector<16x32xbf16>
    %31 = vector.shape_cast %28 : vector<16x32xbf16> to vector<1x1x16x32xbf16>
    tpu.vector_store %arg5[%c0_20, %c1, %c0_21, %c0_22], %31 {strides = array<i32>} : memref<1x4x16x32xbf16, #tpu.memory_space<vmem>>, vector<1x1x16x32xbf16>,
    %32 = vector.extract_strided_slice %7 {offsets = [0, 160], sizes = [16, 32], strides = [1, 1]} : vector<16x384xf32> to vector<16x32xf32>
    %33 = arith.truncf %32 : vector<16x32xf32> to vector<16x32xbf16>
    %c0_23 = arith.constant 0 : index
    %c1_24 = arith.constant 1 : index
    %c0_25 = arith.constant 0 : index
    %c0_26 = arith.constant 0 : index
    %34 = vector.load %arg6[%c0_23, %c1_24, %c0_25, %c0_26] : memref<1x4x16x32xbf16, #tpu.memory_space<vmem>>, vector<1x1x16x32xbf16>
    %35 = vector.shape_cast %34 : vector<1x1x16x32xbf16> to vector<16x32xbf16>
    %36 = vector.shape_cast %33 : vector<16x32xbf16> to vector<1x1x16x32xbf16>
    tpu.vector_store %arg6[%c0_23, %c1_24, %c0_25, %c0_26], %36 {strides = array<i32>} : memref<1x4x16x32xbf16, #tpu.memory_space<vmem>>, vector<1x1x16x32xbf16>,
    %37 = vector.extract_strided_slice %7 {offsets = [0, 288], sizes = [16, 32], strides = [1, 1]} : vector<16x384xf32> to vector<16x32xf32>
    %38 = arith.truncf %37 : vector<16x32xf32> to vector<16x32xbf16>
    %c0_27 = arith.constant 0 : index
    %c1_28 = arith.constant 1 : index
    %c0_29 = arith.constant 0 : index
    %c0_30 = arith.constant 0 : index
    %39 = vector.load %arg7[%c0_27, %c1_28, %c0_29, %c0_30] : memref<1x4x16x32xbf16, #tpu.memory_space<vmem>>, vector<1x1x16x32xbf16>
    %40 = vector.shape_cast %39 : vector<1x1x16x32xbf16> to vector<16x32xbf16>
    %41 = vector.shape_cast %38 : vector<16x32xbf16> to vector<1x1x16x32xbf16>
    tpu.vector_store %arg7[%c0_27, %c1_28, %c0_29, %c0_30], %41 {strides = array<i32>} : memref<1x4x16x32xbf16, #tpu.memory_space<vmem>>, vector<1x1x16x32xbf16>,
    %42 = vector.extract_strided_slice %7 {offsets = [0, 64], sizes = [16, 32], strides = [1, 1]} : vector<16x384xf32> to vector<16x32xf32>
    %cst_31 = arith.constant 0.176776692 : f32
    %43 = vector.broadcast %cst_31 : f32 to vector<16x32xf32>
    %44 = arith.mulf %42, %43 : vector<16x32xf32>
    %45 = arith.truncf %44 : vector<16x32xf32> to vector<16x32xbf16>
    %c0_32 = arith.constant 0 : index
    %c2 = arith.constant 2 : index
    %c0_33 = arith.constant 0 : index
    %c0_34 = arith.constant 0 : index
    %46 = vector.load %arg5[%c0_32, %c2, %c0_33, %c0_34] : memref<1x4x16x32xbf16, #tpu.memory_space<vmem>>, vector<1x1x16x32xbf16>
    %47 = vector.shape_cast %46 : vector<1x1x16x32xbf16> to vector<16x32xbf16>
    %48 = vector.shape_cast %45 : vector<16x32xbf16> to vector<1x1x16x32xbf16>
    tpu.vector_store %arg5[%c0_32, %c2, %c0_33, %c0_34], %48 {strides = array<i32>} : memref<1x4x16x32xbf16, #tpu.memory_space<vmem>>, vector<1x1x16x32xbf16>,
    %49 = vector.extract_strided_slice %7 {offsets = [0, 192], sizes = [16, 32], strides = [1, 1]} : vector<16x384xf32> to vector<16x32xf32>
    %50 = arith.truncf %49 : vector<16x32xf32> to vector<16x32xbf16>
    %c0_35 = arith.constant 0 : index
    %c2_36 = arith.constant 2 : index
    %c0_37 = arith.constant 0 : index
    %c0_38 = arith.constant 0 : index
    %51 = vector.load %arg6[%c0_35, %c2_36, %c0_37, %c0_38] : memref<1x4x16x32xbf16, #tpu.memory_space<vmem>>, vector<1x1x16x32xbf16>
    %52 = vector.shape_cast %51 : vector<1x1x16x32xbf16> to vector<16x32xbf16>
    %53 = vector.shape_cast %50 : vector<16x32xbf16> to vector<1x1x16x32xbf16>
    tpu.vector_store %arg6[%c0_35, %c2_36, %c0_37, %c0_38], %53 {strides = array<i32>} : memref<1x4x16x32xbf16, #tpu.memory_space<vmem>>, vector<1x1x16x32xbf16>,
    %54 = vector.extract_strided_slice %7 {offsets = [0, 320], sizes = [16, 32], strides = [1, 1]} : vector<16x384xf32> to vector<16x32xf32>
    %55 = arith.truncf %54 : vector<16x32xf32> to vector<16x32xbf16>
    %c0_39 = arith.constant 0 : index
    %c2_40 = arith.constant 2 : index
    %c0_41 = arith.constant 0 : index
    %c0_42 = arith.constant 0 : index
    %56 = vector.load %arg7[%c0_39, %c2_40, %c0_41, %c0_42] : memref<1x4x16x32xbf16, #tpu.memory_space<vmem>>, vector<1x1x16x32xbf16>
    %57 = vector.shape_cast %56 : vector<1x1x16x32xbf16> to vector<16x32xbf16>
    %58 = vector.shape_cast %55 : vector<16x32xbf16> to vector<1x1x16x32xbf16>
    tpu.vector_store %arg7[%c0_39, %c2_40, %c0_41, %c0_42], %58 {strides = array<i32>} : memref<1x4x16x32xbf16, #tpu.memory_space<vmem>>, vector<1x1x16x32xbf16>,
    %59 = vector.extract_strided_slice %7 {offsets = [0, 96], sizes = [16, 32], strides = [1, 1]} : vector<16x384xf32> to vector<16x32xf32>
    %cst_43 = arith.constant 0.176776692 : f32
    %60 = vector.broadcast %cst_43 : f32 to vector<16x32xf32>
    %61 = arith.mulf %59, %60 : vector<16x32xf32>
    %62 = arith.truncf %61 : vector<16x32xf32> to vector<16x32xbf16>
    %c0_44 = arith.constant 0 : index
    %c3 = arith.constant 3 : index
    %c0_45 = arith.constant 0 : index
    %c0_46 = arith.constant 0 : index
    %63 = vector.load %arg5[%c0_44, %c3, %c0_45, %c0_46] : memref<1x4x16x32xbf16, #tpu.memory_space<vmem>>, vector<1x1x16x32xbf16>
    %64 = vector.shape_cast %63 : vector<1x1x16x32xbf16> to vector<16x32xbf16>
    %65 = vector.shape_cast %62 : vector<16x32xbf16> to vector<1x1x16x32xbf16>
    tpu.vector_store %arg5[%c0_44, %c3, %c0_45, %c0_46], %65 {strides = array<i32>} : memref<1x4x16x32xbf16, #tpu.memory_space<vmem>>, vector<1x1x16x32xbf16>,
    %66 = vector.extract_strided_slice %7 {offsets = [0, 224], sizes = [16, 32], strides = [1, 1]} : vector<16x384xf32> to vector<16x32xf32>
    %67 = arith.truncf %66 : vector<16x32xf32> to vector<16x32xbf16>
    %c0_47 = arith.constant 0 : index
    %c3_48 = arith.constant 3 : index
    %c0_49 = arith.constant 0 : index
    %c0_50 = arith.constant 0 : index
    %68 = vector.load %arg6[%c0_47, %c3_48, %c0_49, %c0_50] : memref<1x4x16x32xbf16, #tpu.memory_space<vmem>>, vector<1x1x16x32xbf16>
    %69 = vector.shape_cast %68 : vector<1x1x16x32xbf16> to vector<16x32xbf16>
    %70 = vector.shape_cast %67 : vector<16x32xbf16> to vector<1x1x16x32xbf16>
    tpu.vector_store %arg6[%c0_47, %c3_48, %c0_49, %c0_50], %70 {strides = array<i32>} : memref<1x4x16x32xbf16, #tpu.memory_space<vmem>>, vector<1x1x16x32xbf16>,
    %71 = vector.extract_strided_slice %7 {offsets = [0, 352], sizes = [16, 32], strides = [1, 1]} : vector<16x384xf32> to vector<16x32xf32>
    %72 = arith.truncf %71 : vector<16x32xf32> to vector<16x32xbf16>
    %c0_51 = arith.constant 0 : index
    %c3_52 = arith.constant 3 : index
    %c0_53 = arith.constant 0 : index
    %c0_54 = arith.constant 0 : index
    %73 = vector.load %arg7[%c0_51, %c3_52, %c0_53, %c0_54] : memref<1x4x16x32xbf16, #tpu.memory_space<vmem>>, vector<1x1x16x32xbf16>
    %74 = vector.shape_cast %73 : vector<1x1x16x32xbf16> to vector<16x32xbf16>
    %75 = vector.shape_cast %72 : vector<16x32xbf16> to vector<1x1x16x32xbf16>
    tpu.vector_store %arg7[%c0_51, %c3_52, %c0_53, %c0_54], %75 {strides = array<i32>} : memref<1x4x16x32xbf16, #tpu.memory_space<vmem>>, vector<1x1x16x32xbf16>,
    return
  }
  func.func @transform_0(%arg0: i32, %arg1: i32) -> (i32, i32, i32) {
    %c0_i32 = arith.constant 0 : i32
    %c0_i32_0 = arith.constant 0 : i32
    return %arg0, %arg1, %c0_i32 : i32, i32, i32
  }
  func.func @transform_1(%arg0: i32, %arg1: i32) -> (i32, i32) {
    %c0_i32 = arith.constant 0 : i32
    %c0_i32_0 = arith.constant 0 : i32
    %c0_i32_1 = arith.constant 0 : i32
    return %c0_i32, %c0_i32_0 : i32, i32
  }
  func.func @transform_2(%arg0: i32, %arg1: i32) -> (i32, i32) {
    %c0_i32 = arith.constant 0 : i32
    %c0_i32_0 = arith.constant 0 : i32
    %c0_i32_1 = arith.constant 0 : i32
    return %c0_i32, %c0_i32_0 : i32, i32
  }
  func.func @transform_3(%arg0: i32, %arg1: i32) -> (i32, i32, i32, i32) {
    %c0_i32 = arith.constant 0 : i32
    %c0_i32_0 = arith.constant 0 : i32
    %c0_i32_1 = arith.constant 0 : i32
    return %arg0, %c0_i32, %arg1, %c0_i32_0 : i32, i32, i32, i32
  }
  func.func @transform_4(%arg0: i32, %arg1: i32) -> (i32, i32, i32, i32) {
    %c0_i32 = arith.constant 0 : i32
    %c0_i32_0 = arith.constant 0 : i32
    %c0_i32_1 = arith.constant 0 : i32
    return %arg0, %c0_i32, %arg1, %c0_i32_0 : i32, i32, i32, i32
  }
  func.func @transform_5(%arg0: i32, %arg1: i32) -> (i32, i32, i32, i32) {
    %c0_i32 = arith.constant 0 : i32
    %c0_i32_0 = arith.constant 0 : i32
    %c0_i32_1 = arith.constant 0 : i32
    return %arg0, %c0_i32, %arg1, %c0_i32_0 : i32, i32, i32, i32
  }
}

</mosaic_0001>

<llo_original>
// kernel: tpu_custom_call.1
$region0: #{tpu_custom_call.1}
  #allocation0 [shape = 'u32[]', space=smem, size = 0x4, offset = 0x4, fixed_abs, tag = 'smem constant byte address 0x4 - core index']
  #allocation1 [shape = 'u32[144,128]{1,0:T(1,128)}', space=vmem, size = 0x12000, scoped, tag = 'internal scratch']
  %s0 = inlined_call_operand.hbm [shape: f32[2,16,128], index: 0, kind: input, shape index: {}]
  %s1 = inlined_call_operand.hbm [shape: bf16[128,384], index: 1, kind: input, shape index: {}]
  %s2 = inlined_call_operand.vmem [shape: f32[1,384], index: 2, kind: input, shape index: {}]
  %s3 = inlined_call_operand.hbm [shape: bf16[2,4,16,32], index: 3, kind: output, shape index: {0}]
  %s4 = inlined_call_operand.hbm [shape: bf16[2,4,16,32], index: 4, kind: output, shape index: {1}]
  %s5 = inlined_call_operand.hbm [shape: bf16[2,4,16,32], index: 5, kind: output, shape index: {2}]
  %6 = xla_tuple %s3, %s4, %s5
  %s7 = sld [smem:[#allocation0]]
  $region69: #{tpu_custom_call.1} parent=0
    _
  %s9 = ssub.s32 1, %s7
  %s10 = scalar_select 0, %s9, %s7
  $region1: #{tpu_custom_call.1} parent=0
    #allocation2 [shape = 'u8[16384]{0}', space=vmem, size = 0x4000, scoped, tag = 'input window, operand 0']
    #allocation3 [shape = 's32[2]{0}', space=sflag, size = 0x8, scoped, tag = 'scoped memory for tpu_custom_call.1']
    #allocation4 [shape = 's32[2]{0}', space=sflag, size = 0x8, scoped, tag = 'scoped memory for tpu_custom_call.1']
    #allocation5 [shape = 'u8[98304]{0}', space=vmem, size = 0x18000, scoped, tag = 'input window, operand 1, single buffered']
    #allocation6 [shape = 's32[1]{0}', space=sflag, size = 0x4, scoped, tag = 'scoped memory for tpu_custom_call.1']
    #allocation7 [shape = 'u8[32768]{0}', space=vmem, size = 0x8000, scoped, tag = 'output window, operand 0']
    #allocation8 [shape = 'u8[32768]{0}', space=vmem, size = 0x8000, scoped, tag = 'output window, operand 1']
    #allocation9 [shape = 's32[2]{0}', space=sflag, size = 0x8, scoped, tag = 'scoped memory for tpu_custom_call.1']
    #allocation10 [shape = 'u8[32768]{0}', space=vmem, size = 0x8000, scoped, tag = 'output window, operand 2']
    %11 = vsyncpa [#allocation3], 0
    %s12 = scalar_lea.sflag [#allocation3], 1
    %13 = vsyncpa %s12, 0
    %14 = vsyncpa [#allocation6], 0
    %15 = vsyncpa [#allocation4], 0
    %s16 = scalar_lea.sflag [#allocation4], 1
    %17 = vsyncpa %s16, 0
    %18 = vsyncpa [#allocation9], 0
    %s19 = scalar_lea.sflag [#allocation9], 1
    %20 = vsyncpa %s19, 0
    loop: start=0, step=1, limit=4
    $region2: #{tpu_custom_call.1} parent=1 // loop_pre_header
      _
    $region3: #{tpu_custom_call.1} parent=1 // loop_header
      %s22 = sphi 0, %s26
      %p23 = scmp.ge.s32.totalorder %s22, 4
      %s29 = sphi 0, %s41
      %s30 = sphi 0, %s37
      %s31 = sphi 0, %s29
      %s32 = sphi 0, %s30
      %s33 = sphi 0, %s31
      %s34 = sphi 0, %s32
      %s46 = sphi 0, %s48
      %s49 = sphi 0, %s46
      %s50 = sphi 0, %s49
      %s66 = sphi 0, %s50
      %s70 = sphi 0, %s70
      %s72 = sphi 0, %s70
      %s73 = sphi 0, %s72
      %s87 = sphi 0, %s73
      %s91 = sphi 0, %s91
      %s93 = sphi 0, %s91
      %s94 = sphi 0, %s93
      %s108 = sphi 0, %s94
      %s116 = sphi 0, %s118
      %s119 = sphi 0, %s116
      %s120 = sphi 0, %s119
      %s136 = sphi 0, %s120
      %s144 = sphi 0, %s146
      %s147 = sphi 0, %s144
      %s148 = sphi 0, %s147
      %s164 = sphi 0, %s148
      %s172 = sphi 0, %s174
      %s175 = sphi 0, %s172
      %s176 = sphi 0, %s175
      %s192 = sphi 0, %s176
    $region4: #{tpu_custom_call.1} parent=1 // loop_header_branch
      %25 = sbr.rel (%p23) target = $region8
    $region5: #{tpu_custom_call.1} parent=1 // loop_body
      %s27 = ssub.s32 %s22, 1
      %s28 = ssub.s32 %s22, 2
      %s35 = sadd.s32 1, %s30
      %p36 = scmp.ge.s32.totalorder %s35, 1
      %s37 = scalar_select %p36, 0, %s35
      %s38 = sadd.s32 1, %s29
      %s39 = scalar_select %p36, %s38, %s29
      %p40 = scmp.ge.s32.totalorder %s39, 2
      %s41 = scalar_select %p40, 0, %s39
      %s42 = ssub.s32 %s29, %s41
      %s43 = ssub.s32 %s30, %s37
      %s44 = sor.u32 %s42, %s43
      %p45 = scmp.eq.s32.totalorder %s44, 0
      %s47 = sadd.s32 %s46, 1
      %s48 = scalar_select %p45, %s46, %s47
      %p51 = pneg %p45
      %p52 = scmp.eq.s32.totalorder %s22, 1
      %p53 = por %p51, %p52
      %p54 = scmp.ne.s32.totalorder %s46, %s49
      %p55 = scmp.eq.s32.totalorder %s22, 0
      %p56 = por %p54, %p55
      %p57 = scmp.ne.s32.totalorder %s46, %s49
      %p58 = scmp.eq.s32.totalorder %s27, 1
      %p59 = por %p57, %p58
      %p60 = scmp.ne.s32.totalorder %s49, %s50
      %p61 = scmp.eq.s32.totalorder %s27, 0
      %p62 = por %p60, %p61
      %p63 = scmp.ne.s32.totalorder %s49, %s50
      %p64 = scmp.eq.s32.totalorder %s28, 1
      %p65 = por %p63, %p64
      %p67 = scmp.ne.s32.totalorder %s50, %s66
      %p68 = scmp.eq.s32.totalorder %s28, 0
      %p69 = por %p67, %p68
      %s71 = sadd.s32 %s70, 1
      %p74 = scmp.eq.s32.totalorder %s22, 1
      %p75 = scmp.ne.s32.totalorder %s70, %s72
      %p76 = scmp.eq.s32.totalorder %s22, 0
      %p77 = por %p75, %p76
      %p78 = scmp.ne.s32.totalorder %s70, %s72
      %p79 = scmp.eq.s32.totalorder %s27, 1
      %p80 = por %p78, %p79
      %p81 = scmp.ne.s32.totalorder %s72, %s73
      %p82 = scmp.eq.s32.totalorder %s27, 0
      %p83 = por %p81, %p82
      %p84 = scmp.ne.s32.totalorder %s72, %s73
      %p85 = scmp.eq.s32.totalorder %s28, 1
      %p86 = por %p84, %p85
      %p88 = scmp.ne.s32.totalorder %s73, %s87
      %p89 = scmp.eq.s32.totalorder %s28, 0
      %p90 = por %p88, %p89
      %s92 = sadd.s32 %s91, 1
      %p95 = scmp.eq.s32.totalorder %s22, 1
      %p96 = scmp.ne.s32.totalorder %s91, %s93
      %p97 = scmp.eq.s32.totalorder %s22, 0
      %p98 = por %p96, %p97
      %p99 = scmp.ne.s32.totalorder %s91, %s93
      %p100 = scmp.eq.s32.totalorder %s27, 1
      %p101 = por %p99, %p100
      %p102 = scmp.ne.s32.totalorder %s93, %s94
      %p103 = scmp.eq.s32.totalorder %s27, 0
      %p104 = por %p102, %p103
      %p105 = scmp.ne.s32.totalorder %s93, %s94
      %p106 = scmp.eq.s32.totalorder %s28, 1
      %p107 = por %p105, %p106
      %p109 = scmp.ne.s32.totalorder %s94, %s108
      %p110 = scmp.eq.s32.totalorder %s28, 0
      %p111 = por %p109, %p110
      %s112 = ssub.s32 %s29, %s41
      %s113 = ssub.s32 %s30, %s37
      %s114 = sor.u32 %s112, %s113
      %p115 = scmp.eq.s32.totalorder %s114, 0
      %s117 = sadd.s32 %s116, 1
      %s118 = scalar_select %p115, %s116, %s117
      %p121 = pneg %p115
      %p122 = scmp.eq.s32.totalorder %s22, 1
      %p123 = por %p121, %p122
      %p124 = scmp.ne.s32.totalorder %s116, %s119
      %p125 = scmp.eq.s32.totalorder %s22, 0
      %p126 = por %p124, %p125
      %p127 = scmp.ne.s32.totalorder %s116, %s119
      %p128 = scmp.eq.s32.totalorder %s27, 1
      %p129 = por %p127, %p128
      %p130 = scmp.ne.s32.totalorder %s119, %s120
      %p131 = scmp.eq.s32.totalorder %s27, 0
      %p132 = por %p130, %p131
      %p133 = scmp.ne.s32.totalorder %s119, %s120
      %p134 = scmp.eq.s32.totalorder %s28, 1
      %p135 = por %p133, %p134
      %p137 = scmp.ne.s32.totalorder %s120, %s136
      %p138 = scmp.eq.s32.totalorder %s28, 0
      %p139 = por %p137, %p138
      %s140 = ssub.s32 %s29, %s41
      %s141 = ssub.s32 %s30, %s37
      %s142 = sor.u32 %s140, %s141
      %p143 = scmp.eq.s32.totalorder %s142, 0
      %s145 = sadd.s32 %s144, 1
      %s146 = scalar_select %p143, %s144, %s145
      %p149 = pneg %p143
      %p150 = scmp.eq.s32.totalorder %s22, 1
      %p151 = por %p149, %p150
      %p152 = scmp.ne.s32.totalorder %s144, %s147
      %p153 = scmp.eq.s32.totalorder %s22, 0
      %p154 = por %p152, %p153
      %p155 = scmp.ne.s32.totalorder %s144, %s147
      %p156 = scmp.eq.s32.totalorder %s27, 1
      %p157 = por %p155, %p156
      %p158 = scmp.ne.s32.totalorder %s147, %s148
      %p159 = scmp.eq.s32.totalorder %s27, 0
      %p160 = por %p158, %p159
      %p161 = scmp.ne.s32.totalorder %s147, %s148
      %p162 = scmp.eq.s32.totalorder %s28, 1
      %p163 = por %p161, %p162
      %p165 = scmp.ne.s32.totalorder %s148, %s164
      %p166 = scmp.eq.s32.totalorder %s28, 0
      %p167 = por %p165, %p166
      %s168 = ssub.s32 %s29, %s41
      %s169 = ssub.s32 %s30, %s37
      %s170 = sor.u32 %s168, %s169
      %p171 = scmp.eq.s32.totalorder %s170, 0
      %s173 = sadd.s32 %s172, 1
      %s174 = scalar_select %p171, %s172, %s173
      %p177 = pneg %p171
      %p178 = scmp.eq.s32.totalorder %s22, 1
      %p179 = por %p177, %p178
      %p180 = scmp.ne.s32.totalorder %s172, %s175
      %p181 = scmp.eq.s32.totalorder %s22, 0
      %p182 = por %p180, %p181
      %p183 = scmp.ne.s32.totalorder %s172, %s175
      %p184 = scmp.eq.s32.totalorder %s27, 1
      %p185 = por %p183, %p184
      %p186 = scmp.ne.s32.totalorder %s175, %s176
      %p187 = scmp.eq.s32.totalorder %s27, 0
      %p188 = por %p186, %p187
      %p189 = scmp.ne.s32.totalorder %s175, %s176
      %p190 = scmp.eq.s32.totalorder %s28, 1
      %p191 = por %p189, %p190
      %p193 = scmp.ne.s32.totalorder %s176, %s192
      %p194 = scmp.eq.s32.totalorder %s28, 0
      %p195 = por %p193, %p194
      %p196 = scmp.le.s32.totalorder 1, %s22
      %p197 = scmp.lt.s32.totalorder %s22, 3
      %p198 = pnand %p196, %p197
      %p199 = pneg %p198
      // Predicated region
      $region9: #{tpu_custom_call.1} parent=5 // pred_check
        _
      $region10: #{tpu_custom_call.1} parent=5 // pred_check_branch
        %201 = sbr.rel (%p198) target = $region12
      $region11: #{tpu_custom_call.1} parent=5 // pred_region
        %s202 = ssub.s32 %s22, 1
        // Predicated region
        $region13: #{tpu_custom_call.1} parent=11 // pred_check
          %p203 = pneg %p83
        $region14: #{tpu_custom_call.1} parent=11 // pred_check_branch
          %205 = sbr.rel (%p203) target = $region16
        $region15: #{tpu_custom_call.1} parent=11 // pred_region
          %s207 = ssub.s32 3072, 3072
          %208 = vsyncadd [#allocation6], %s207
          %s209 = sshll.u32 [#allocation5], 4
          %s210 = int_to_ptr.vmem [resolvable:$true] %s209
          %215 = dma.hbm_to_vmem [thread:$0]  %s1, 3072, %s210, [#allocation6], 192, 192, 12
        $region16: #{tpu_custom_call.1} parent=11 // pred_fallthru
          _
        // Predicated region
        $region17: #{tpu_custom_call.1} parent=11 // pred_check
          %p216 = pneg %p104
        $region18: #{tpu_custom_call.1} parent=11 // pred_check_branch
          %218 = sbr.rel (%p216) target = $region20
        $region19: #{tpu_custom_call.1} parent=11 // pred_region
          _
        $region20: #{tpu_custom_call.1} parent=11 // pred_fallthru
          _
      $region12: #{tpu_custom_call.1} parent=5 // pred_fallthru
        _
      %p219 = scmp.lt.s32.totalorder %s22, 2
      // Predicated region
      $region21: #{tpu_custom_call.1} parent=5 // pred_check
        %p220 = pneg %p219
      $region22: #{tpu_custom_call.1} parent=5 // pred_check_branch
        %222 = sbr.rel (%p220) target = $region24
      $region23: #{tpu_custom_call.1} parent=5 // pred_region
        // Predicated region
        $region25: #{tpu_custom_call.1} parent=23 // pred_check
          %p223 = pneg %p56
        $region26: #{tpu_custom_call.1} parent=23 // pred_check_branch
          %225 = sbr.rel (%p223) target = $region28
        $region27: #{tpu_custom_call.1} parent=23 // pred_region
          %s226 = sand.u32 %s46, 1
          %s227 = scalar_lea.sflag [#allocation3], %s226
          %s228 = sand.u32 %s46, 1
          %s229 = smul.addr %s228, 16
          %s230 = scalar_lea.vmem [#allocation2], %s229
          %s231 = smul.u32 2, %s30
          %s233 = ssub.s32 256, 256
          %234 = vsyncadd %s227, %s233
          %s235 = smul.addr %s29, 2
          %s236 = sadd.s32 %s231, %s235
          %s237 = smul.addr %s236, 128
          %s238 = scalar_lea.hbm %s0, %s237
          %s239 = sshll.u32 %s230, 4
          %s240 = int_to_ptr.vmem [resolvable:$true] %s239
          %245 = dma.hbm_to_vmem [thread:$0]  %s238, 256, %s240, %s227, 128, 128, 8
        $region28: #{tpu_custom_call.1} parent=23 // pred_fallthru
          _
      $region24: #{tpu_custom_call.1} parent=5 // pred_fallthru
        _
      %p246 = scmp.le.s32.totalorder 1, %s22
      %p247 = scmp.lt.s32.totalorder %s22, 3
      %p248 = pnand %p246, %p247
      %p249 = pneg %p248
      // Predicated region
      $region29: #{tpu_custom_call.1} parent=5 // pred_check
        _
      $region30: #{tpu_custom_call.1} parent=5 // pred_check_branch
        %251 = sbr.rel (%p248) target = $region32
      $region31: #{tpu_custom_call.1} parent=5 // pred_region
        %s252 = ssub.s32 %s22, 1
        %s253 = sand.u32 %s49, 1
        %s254 = scalar_lea.sflag [#allocation3], %s253
        %s255 = sand.u32 %s49, 1
        %s256 = smul.addr %s255, 16
        %s257 = scalar_lea.vmem [#allocation2], %s256
        // Predicated region
        $region33: #{tpu_custom_call.1} parent=31 // pred_check
          %p258 = pneg %p62
        $region34: #{tpu_custom_call.1} parent=31 // pred_check_branch
          %260 = sbr.rel (%p258) target = $region36
        $region35: #{tpu_custom_call.1} parent=31 // pred_region
          %261 = dma.done %s254, 256
        $region36: #{tpu_custom_call.1} parent=31 // pred_fallthru
          _
        // Predicated region
        $region37: #{tpu_custom_call.1} parent=31 // pred_check
          %p262 = pneg %p83
        $region38: #{tpu_custom_call.1} parent=31 // pred_check_branch
          %264 = sbr.rel (%p262) target = $region40
        $region39: #{tpu_custom_call.1} parent=31 // pred_region
          %265 = dma.done [#allocation6], 3072
        $region40: #{tpu_custom_call.1} parent=31 // pred_fallthru
          _
        %s266 = sand.u32 %s49, 1
        %s267 = scalar_lea.sflag [#allocation3], %s266
        %s268 = sand.u32 %s49, 1
        %s269 = smul.addr %s268, 16
        %s270 = scalar_lea.vmem [#allocation2], %s269
        %p271 = pneg %p62
        %p272 = pneg %p59
        %p273 = pneg %p83
        %p274 = pneg %p80
        %p275 = pneg %p104
        %p276 = pneg %p101
        %p277 = pneg %p132
        %p278 = pneg %p129
        %s279 = sand.u32 %s119, 1
        %s280 = scalar_lea.sflag [#allocation4], %s279
        %s281 = sand.u32 %s119, 1
        %s282 = smul.addr %s281, 32
        %s283 = scalar_lea.vmem [#allocation7], %s282
        %p284 = pneg %p160
        %p285 = pneg %p157
        %s286 = sand.u32 %s27, 1
        %s287 = scalar_lea.sflag [#allocation9], %s286
        %s288 = sand.u32 %s147, 1
        %s289 = smul.addr %s288, 32
        %s290 = scalar_lea.vmem [#allocation8], %s289
        %p291 = pneg %p188
        %p292 = pneg %p185
        %s293 = sand.u32 %s27, 1
        %s294 = scalar_lea.sflag [#allocation9], %s293
        %s295 = sand.u32 %s175, 1
        %s296 = smul.addr %s295, 32
        %s297 = scalar_lea.vmem [#allocation10], %s296
        %s298 = smul.u32 2, %s32
        %s299 = smul.u32 2, %s32
        %s300 = smul.u32 2, %s32
        %s301 = smul.u32 2, %s32
        %v303 = vld [vmem:[%s257] sm:$0xff]
        %v304 = vld [vmem:[%s257 + $0x8] sm:$0xff]
        %v305 = vpack.c.bf16 %v304, %v303
        %v306 = vld [vmem:[#allocation5] sm:$0xff]
        %v307 = vld [vmem:[#allocation5 + $0x8] sm:$0xf]
        %v308 = vld [vmem:[#allocation5 + $0xc] sm:$0xff]
        %v309 = vld [vmem:[#allocation5 + $0x14] sm:$0xf]
        %v310 = vld [vmem:[#allocation5 + $0x18] sm:$0xff]
        %v311 = vld [vmem:[#allocation5 + $0x20] sm:$0xf]
        %v312 = vld [vmem:[#allocation5 + $0x24] sm:$0xff]
        %v313 = vld [vmem:[#allocation5 + $0x2c] sm:$0xf]
        %v314 = vld [vmem:[#allocation5 + $0x30] sm:$0xff]
        %v315 = vld [vmem:[#allocation5 + $0x38] sm:$0xf]
        %v316 = vld [vmem:[#allocation5 + $0x3c] sm:$0xff]
        %v317 = vld [vmem:[#allocation5 + $0x44] sm:$0xf]
        %v318 = vld [vmem:[#allocation5 + $0x48] sm:$0xff]
        %v319 = vld [vmem:[#allocation5 + $0x50] sm:$0xf]
        %v320 = vld [vmem:[#allocation5 + $0x54] sm:$0xff]
        %v321 = vld [vmem:[#allocation5 + $0x5c] sm:$0xf]
        %v322 = vld [vmem:[#allocation5 + $0x60] sm:$0xff]
        %v323 = vld [vmem:[#allocation5 + $0x68] sm:$0xf]
        %v324 = vld [vmem:[#allocation5 + $0x6c] sm:$0xff]
        %v325 = vld [vmem:[#allocation5 + $0x74] sm:$0xf]
        %v326 = vld [vmem:[#allocation5 + $0x78] sm:$0xff]
        %v327 = vld [vmem:[#allocation5 + $0x80] sm:$0xf]
        %v328 = vld [vmem:[#allocation5 + $0x84] sm:$0xff]
        %v329 = vld [vmem:[#allocation5 + $0x8c] sm:$0xf]
        %v330 = vld [vmem:[#allocation5 + $0x90] sm:$0xff]
        %v331 = vld [vmem:[#allocation5 + $0x98] sm:$0xf]
        %v332 = vld [vmem:[#allocation5 + $0x9c] sm:$0xff]
        %v333 = vld [vmem:[#allocation5 + $0xa4] sm:$0xf]
        %v334 = vld [vmem:[#allocation5 + $0xa8] sm:$0xff]
        %v335 = vld [vmem:[#allocation5 + $0xb0] sm:$0xf]
        %v336 = vld [vmem:[#allocation5 + $0xb4] sm:$0xff]
        %v337 = vld [vmem:[#allocation5 + $0xbc] sm:$0xf]
        %v338 = vld [vmem:[%s2] sm:$0x7]
        %v340 = vlaneseq
        %v341 = vshrl.u32 %v340, 7
        %v342 = vsub.s32 0, %v341
        %v343 = vrot.slane %v338, %v342
        %v344 = vlaneseq
        %v345 = vshrl.u32 %v344, 7
        %v346 = vsub.s32 1, %v345
        %v347 = vrot.slane %v338, %v346
        %v348 = vlaneseq
        %v349 = vshrl.u32 %v348, 7
        %v350 = vsub.s32 2, %v349
        %v351 = vrot.slane %v338, %v350
        %v387 = vunpack.c.l.b16 %v306
        %v388 = vunpack.c.h.b16 %v306
        %v389 = vunpack.c.l.b16 %v307
        %v390 = vunpack.c.l.b16 %v308
        %v391 = vunpack.c.h.b16 %v308
        %v392 = vunpack.c.l.b16 %v309
        %v393 = vunpack.c.l.b16 %v310
        %v394 = vunpack.c.h.b16 %v310
        %v395 = vunpack.c.l.b16 %v311
        %v396 = vunpack.c.l.b16 %v312
        %v397 = vunpack.c.h.b16 %v312
        %v398 = vunpack.c.l.b16 %v313
        %v399 = vunpack.c.l.b16 %v314
        %v400 = vunpack.c.h.b16 %v314
        %v401 = vunpack.c.l.b16 %v315
        %v402 = vunpack.c.l.b16 %v316
        %v403 = vunpack.c.h.b16 %v316
        %v404 = vunpack.c.l.b16 %v317
        %v405 = vunpack.c.l.b16 %v318
        %v406 = vunpack.c.h.b16 %v318
        %v407 = vunpack.c.l.b16 %v319
        %v408 = vunpack.c.l.b16 %v320
        %v409 = vunpack.c.h.b16 %v320
        %v410 = vunpack.c.l.b16 %v321
        %v411 = vunpack.c.l.b16 %v322
        %v412 = vunpack.c.h.b16 %v322
        %v413 = vunpack.c.l.b16 %v323
        %v414 = vunpack.c.l.b16 %v324
        %v415 = vunpack.c.h.b16 %v324
        %v416 = vunpack.c.l.b16 %v325
        %v417 = vunpack.c.l.b16 %v326
        %v418 = vunpack.c.h.b16 %v326
        %v419 = vunpack.c.l.b16 %v327
        %v420 = vunpack.c.l.b16 %v328
        %v421 = vunpack.c.h.b16 %v328
        %v422 = vunpack.c.l.b16 %v329
        %v423 = vunpack.c.l.b16 %v330
        %v424 = vunpack.c.h.b16 %v330
        %v425 = vunpack.c.l.b16 %v331
        %v426 = vunpack.c.l.b16 %v332
        %v427 = vunpack.c.h.b16 %v332
        %v428 = vunpack.c.l.b16 %v333
        %v429 = vunpack.c.l.b16 %v334
        %v430 = vunpack.c.h.b16 %v334
        %v431 = vunpack.c.l.b16 %v335
        %v432 = vunpack.c.l.b16 %v336
        %v433 = vunpack.c.h.b16 %v336
        %v434 = vunpack.c.l.b16 %v337
        %v435 = vpack.c.b16 %v390, %v387
        %v436 = vpack.c.b16 %v391, %v388
        %v437 = vpack.c.b16 %v392, %v389
        %v438 = vpack.c.b16 %v396, %v393
        %v439 = vpack.c.b16 %v397, %v394
        %v440 = vpack.c.b16 %v398, %v395
        %v441 = vpack.c.b16 %v402, %v399
        %v442 = vpack.c.b16 %v403, %v400
        %v443 = vpack.c.b16 %v404, %v401
        %v444 = vpack.c.b16 %v408, %v405
        %v445 = vpack.c.b16 %v409, %v406
        %v446 = vpack.c.b16 %v410, %v407
        %v447 = vpack.c.b16 %v414, %v411
        %v448 = vpack.c.b16 %v415, %v412
        %v449 = vpack.c.b16 %v416, %v413
        %v450 = vpack.c.b16 %v420, %v417
        %v451 = vpack.c.b16 %v421, %v418
        %v452 = vpack.c.b16 %v422, %v419
        %v453 = vpack.c.b16 %v426, %v423
        %v454 = vpack.c.b16 %v427, %v424
        %v455 = vpack.c.b16 %v428, %v425
        %v456 = vpack.c.b16 %v432, %v429
        %v457 = vpack.c.b16 %v433, %v430
        %v458 = vpack.c.b16 %v434, %v431
        %483 = vmatprep.subr.bf16.mxu0 %v436
        %484 = vmatpush1.bf16.msra.mxu0 %v435
        %485 = vmatprep.subr.bf16.mxu0 %v439
        %486 = vmatpush1.bf16.msra.mxu0 %v438
        %487 = vmatprep.subr.bf16.mxu0 %v442
        %488 = vmatpush1.bf16.msra.mxu0 %v441
        %489 = vmatprep.subr.bf16.mxu0 %v445
        %490 = vmatpush1.bf16.msra.mxu0 %v444
        %491 = vmatprep.subr.bf16.mxu0 %v448
        %492 = vmatpush1.bf16.msra.mxu0 %v447
        %493 = vmatprep.subr.bf16.mxu0 %v451
        %494 = vmatpush1.bf16.msra.mxu0 %v450
        %495 = vmatprep.subr.bf16.mxu0 %v454
        %496 = vmatpush1.bf16.msra.mxu0 %v453
        %497 = vmatprep.subr.bf16.mxu0 %v457
        %498 = vmatpush1.bf16.msra.mxu0 %v456
        %499 = vmatprep.subr.bf16.mxu0 0
        %500 = vmatpush1.bf16.msra.mxu0 0
        %501 = vmatprep.subr.bf16.mxu0 0
        %502 = vmatpush1.bf16.msra.mxu0 0
        %503 = vmatprep.subr.bf16.mxu0 0
        %504 = vmatpush1.bf16.msra.mxu0 0
        %505 = vmatprep.subr.bf16.mxu0 0
        %506 = vmatpush1.bf16.msra.mxu0 0
        %507 = vmatprep.subr.bf16.mxu0 0
        %508 = vmatpush1.bf16.msra.mxu0 0
        %509 = vmatprep.subr.bf16.mxu0 0
        %510 = vmatpush1.bf16.msra.mxu0 0
        %511 = vmatprep.subr.bf16.mxu0 0
        %512 = vmatpush1.bf16.msra.mxu0 0
        %513 = vmatprep.subr.bf16.mxu0 0
        %514 = vmatpush1.bf16.msra.mxu0 0
        %515 = vmatprep.mubr.bf16.mxu0 0
        %516 = vmatmul.mubr.bf16.gmra.mrb[0].mxu0 %v305
        %v517 = vpop.f32.mrb[0].mxu0
        %v518 = vadd.f32 %v343, %v517
        %v519 = vpop.f32.mrb[0].mxu0
        %v520 = vadd.f32 %v347, %v519
        %v521 = vpop.f32.mrb[0].mxu0
        %v522 = vadd.f32 %v343, %v521
        %v523 = vpop.f32.mrb[0].mxu0
        %v524 = vadd.f32 %v347, %v523
        %525 = vdwg.mxu0
        %526 = vmatprep.subr.bf16.mxu0 0
        %527 = vmatpush1.bf16.msra.mxu0 %v437
        %528 = vmatprep.subr.bf16.mxu0 0
        %529 = vmatpush1.bf16.msra.mxu0 %v440
        %530 = vmatprep.subr.bf16.mxu0 0
        %531 = vmatpush1.bf16.msra.mxu0 %v443
        %532 = vmatprep.subr.bf16.mxu0 0
        %533 = vmatpush1.bf16.msra.mxu0 %v446
        %534 = vmatprep.subr.bf16.mxu0 0
        %535 = vmatpush1.bf16.msra.mxu0 %v449
        %536 = vmatprep.subr.bf16.mxu0 0
        %537 = vmatpush1.bf16.msra.mxu0 %v452
        %538 = vmatprep.subr.bf16.mxu0 0
        %539 = vmatpush1.bf16.msra.mxu0 %v455
        %540 = vmatprep.subr.bf16.mxu0 0
        %541 = vmatpush1.bf16.msra.mxu0 %v458
        %542 = vmatprep.subr.bf16.mxu0 0
        %543 = vmatpush1.bf16.msra.mxu0 0
        %544 = vmatprep.subr.bf16.mxu0 0
        %545 = vmatpush1.bf16.msra.mxu0 0
        %546 = vmatprep.subr.bf16.mxu0 0
        %547 = vmatpush1.bf16.msra.mxu0 0
        %548 = vmatprep.subr.bf16.mxu0 0
        %549 = vmatpush1.bf16.msra.mxu0 0
        %550 = vmatprep.subr.bf16.mxu0 0
        %551 = vmatpush1.bf16.msra.mxu0 0
        %552 = vmatprep.subr.bf16.mxu0 0
        %553 = vmatpush1.bf16.msra.mxu0 0
        %554 = vmatprep.subr.bf16.mxu0 0
        %555 = vmatpush1.bf16.msra.mxu0 0
        %556 = vmatprep.subr.bf16.mxu0 0
        %557 = vmatpush1.bf16.msra.mxu0 0
        %558 = vmatprep.mubr.bf16.mxu0 0
        %559 = vmatmul.mubr.bf16.gmra.mrb[0].mxu0 %v305
        %v560 = vpop.f32.mrb[0].mxu0
        %v561 = vadd.f32 %v351, %v560
        %v562 = vpop.f32.mrb[0].mxu0
        %v563 = vpop.f32.mrb[0].mxu0
        %v564 = vadd.f32 %v351, %v563
        %v565 = vpop.f32.mrb[0].mxu0
        %566 = vdwg.mxu0
        %v567 = vmul.f32 %v518, 0.17677669
        %v568 = vmul.f32 %v522, 0.17677669
        %v569 = vpack.c.bf16 %v568, %v567
        %v571 = vunpack.c.l.b16 %v569
        %v572 = vunpack.c.h.b16 %v569
        %v573 = vpack.c.b16 %v571, %v571
        %v574 = vpack.c.b16 %v572, %v572
        %vm577 = vcmask 257024
        %578 = vst.msk [vmem:[%s283] sm:$0xf] %vm577, %v573
        %579 = vst.msk [vmem:[%s283 + $0x4] sm:$0xf] %vm577, %v574
        %v580 = vpack.c.bf16 %v524, %v520
        %v582 = vunpack.c.l.b16 %v580
        %v583 = vunpack.c.h.b16 %v580
        %v584 = vpack.c.b16 %v582, %v582
        %v585 = vpack.c.b16 %v583, %v583
        %588 = vst.msk [vmem:[%s290] sm:$0xf] %vm577, %v584
        %589 = vst.msk [vmem:[%s290 + $0x4] sm:$0xf] %vm577, %v585
        %v590 = vpack.c.bf16 %v564, %v561
        %v592 = vunpack.c.l.b16 %v590
        %v593 = vunpack.c.h.b16 %v590
        %v594 = vpack.c.b16 %v592, %v592
        %v595 = vpack.c.b16 %v593, %v593
        %598 = vst.msk [vmem:[%s297] sm:$0xf] %vm577, %v594
        %599 = vst.msk [vmem:[%s297 + $0x4] sm:$0xf] %vm577, %v595
        %600 = vrot.lane.b32.xlu0 %v573, 96
        %v601 = vpop.permute.xlu0 %600
        %602 = vrot.lane.b32.xlu0 %v574, 96
        %v603 = vpop.permute.xlu0 %602
        %s606 = scalar_lea.vmem %s283, 8 [#allocation7]
        %607 = vst.msk [vmem:[%s606] sm:$0xf] %vm577, %v601
        %608 = vst.msk [vmem:[%s606 + $0x4] sm:$0xf] %vm577, %v603
        %609 = vrot.lane.b32.xlu0 %v584, 96
        %v610 = vpop.permute.xlu0 %609
        %611 = vrot.lane.b32.xlu0 %v585, 96
        %v612 = vpop.permute.xlu0 %611
        %s615 = scalar_lea.vmem %s290, 8 [#allocation8]
        %616 = vst.msk [vmem:[%s615] sm:$0xf] %vm577, %v610
        %617 = vst.msk [vmem:[%s615 + $0x4] sm:$0xf] %vm577, %v612
        %618 = vrot.lane.b32.xlu0 %v594, 96
        %v619 = vpop.permute.xlu0 %618
        %620 = vrot.lane.b32.xlu0 %v595, 96
        %v621 = vpop.permute.xlu0 %620
        %s624 = scalar_lea.vmem %s297, 8 [#allocation10]
        %625 = vst.msk [vmem:[%s624] sm:$0xf] %vm577, %v619
        %626 = vst.msk [vmem:[%s624 + $0x4] sm:$0xf] %vm577, %v621
        %627 = vrot.lane.b32.xlu0 %v573, 64
        %v628 = vpop.permute.xlu0 %627
        %629 = vrot.lane.b32.xlu0 %v574, 64
        %v630 = vpop.permute.xlu0 %629
        %s633 = scalar_lea.vmem %s283, 16 [#allocation7]
        %634 = vst.msk [vmem:[%s633] sm:$0xf] %vm577, %v628
        %635 = vst.msk [vmem:[%s633 + $0x4] sm:$0xf] %vm577, %v630
        %636 = vrot.lane.b32.xlu0 %v584, 64
        %v637 = vpop.permute.xlu0 %636
        %638 = vrot.lane.b32.xlu0 %v585, 64
        %v639 = vpop.permute.xlu0 %638
        %s642 = scalar_lea.vmem %s290, 16 [#allocation8]
        %643 = vst.msk [vmem:[%s642] sm:$0xf] %vm577, %v637
        %644 = vst.msk [vmem:[%s642 + $0x4] sm:$0xf] %vm577, %v639
        %645 = vrot.lane.b32.xlu0 %v594, 64
        %v646 = vpop.permute.xlu0 %645
        %647 = vrot.lane.b32.xlu0 %v595, 64
        %v648 = vpop.permute.xlu0 %647
        %s651 = scalar_lea.vmem %s297, 16 [#allocation10]
        %652 = vst.msk [vmem:[%s651] sm:$0xf] %vm577, %v646
        %653 = vst.msk [vmem:[%s651 + $0x4] sm:$0xf] %vm577, %v648
        %654 = vrot.lane.b32.xlu0 %v573, 32
        %v655 = vpop.permute.xlu0 %654
        %656 = vrot.lane.b32.xlu0 %v574, 32
        %v657 = vpop.permute.xlu0 %656
        %s660 = scalar_lea.vmem %s283, 24 [#allocation7]
        %661 = vst.msk [vmem:[%s660] sm:$0xf] %vm577, %v655
        %662 = vst.msk [vmem:[%s660 + $0x4] sm:$0xf] %vm577, %v657
        %663 = vrot.lane.b32.xlu0 %v584, 32
        %v664 = vpop.permute.xlu0 %663
        %665 = vrot.lane.b32.xlu0 %v585, 32
        %v666 = vpop.permute.xlu0 %665
        %s669 = scalar_lea.vmem %s290, 24 [#allocation8]
        %670 = vst.msk [vmem:[%s669] sm:$0xf] %vm577, %v664
        %671 = vst.msk [vmem:[%s669 + $0x4] sm:$0xf] %vm577, %v666
        %672 = vrot.lane.b32.xlu0 %v594, 32
        %v673 = vpop.permute.xlu0 %672
        %674 = vrot.lane.b32.xlu0 %v595, 32
        %v675 = vpop.permute.xlu0 %674
        %s678 = scalar_lea.vmem %s297, 24 [#allocation10]
        %679 = vst.msk [vmem:[%s678] sm:$0xf] %vm577, %v673
        %680 = vst.msk [vmem:[%s678 + $0x4] sm:$0xf] %vm577, %v675
        %s681 = sand.u32 %s119, 1
        %s682 = scalar_lea.sflag [#allocation4], %s681
        %s683 = sand.u32 %s119, 1
        %s684 = smul.addr %s683, 32
        %s685 = scalar_lea.vmem [#allocation7], %s684
        %s686 = sand.u32 %s27, 1
        %s687 = scalar_lea.sflag [#allocation9], %s686
        %s688 = sand.u32 %s147, 1
        %s689 = smul.addr %s688, 32
        %s690 = scalar_lea.vmem [#allocation8], %s689
        %s691 = sand.u32 %s27, 1
        %s692 = scalar_lea.sflag [#allocation9], %s691
        %s693 = sand.u32 %s175, 1
        %s694 = smul.addr %s693, 32
        %s695 = scalar_lea.vmem [#allocation10], %s694
        // Predicated region
        $region41: #{tpu_custom_call.1} parent=31 // pred_check
          %p696 = pneg %p129
        $region42: #{tpu_custom_call.1} parent=31 // pred_check_branch
          %698 = sbr.rel (%p696) target = $region44
        $region43: #{tpu_custom_call.1} parent=31 // pred_region
          %s699 = smul.u32 2, %s32
          %s701 = ssub.s32 512, 512
          %702 = vsyncadd %s682, %s701
          %s703 = smul.addr %s31, 8
          %s704 = sadd.s32 %s699, %s703
          %s705 = smul.addr %s704, 64
          %s706 = scalar_lea.hbm %s3, %s705
          %s707 = sshll.u32 %s685, 4
          %s708 = int_to_ptr.vmem [resolvable:$true] %s707
          %713 = dma.vmem_to_hbm [thread:$0]  %s708, 512, %s706, %s682, 64, 64, 4
        $region44: #{tpu_custom_call.1} parent=31 // pred_fallthru
          _
        // Predicated region
        $region45: #{tpu_custom_call.1} parent=31 // pred_check
          %p714 = pneg %p157
        $region46: #{tpu_custom_call.1} parent=31 // pred_check_branch
          %716 = sbr.rel (%p714) target = $region48
        $region47: #{tpu_custom_call.1} parent=31 // pred_region
          %s717 = smul.u32 2, %s32
          %s719 = ssub.s32 512, 512
          %720 = vsyncadd %s687, %s719
          %s721 = smul.addr %s31, 8
          %s722 = sadd.s32 %s717, %s721
          %s723 = smul.addr %s722, 64
          %s724 = scalar_lea.hbm %s4, %s723
          %s725 = sshll.u32 %s690, 4
          %s726 = int_to_ptr.vmem [resolvable:$true] %s725
          %731 = dma.vmem_to_hbm [thread:$0]  %s726, 512, %s724, %s687, 64, 64, 4
        $region48: #{tpu_custom_call.1} parent=31 // pred_fallthru
          _
        // Predicated region
        $region49: #{tpu_custom_call.1} parent=31 // pred_check
          %p732 = pneg %p185
        $region50: #{tpu_custom_call.1} parent=31 // pred_check_branch
          %734 = sbr.rel (%p732) target = $region52
        $region51: #{tpu_custom_call.1} parent=31 // pred_region
          %s735 = smul.u32 2, %s32
          %s737 = ssub.s32 512, 512
          %738 = vsyncadd %s692, %s737
          %s739 = smul.addr %s31, 8
          %s740 = sadd.s32 %s735, %s739
          %s741 = smul.addr %s740, 64
          %s742 = scalar_lea.hbm %s5, %s741
          %s743 = sshll.u32 %s695, 4
          %s744 = int_to_ptr.vmem [resolvable:$true] %s743
          %749 = dma.vmem_to_hbm [thread:$0]  %s744, 512, %s742, %s692, 64, 64, 4
        $region52: #{tpu_custom_call.1} parent=31 // pred_fallthru
          _
      $region32: #{tpu_custom_call.1} parent=5 // pred_fallthru
        _
      %p750 = scmp.le.s32.totalorder 2, %s22
      // Predicated region
      $region53: #{tpu_custom_call.1} parent=5 // pred_check
        %p751 = pneg %p750
      $region54: #{tpu_custom_call.1} parent=5 // pred_check_branch
        %753 = sbr.rel (%p751) target = $region56
      $region55: #{tpu_custom_call.1} parent=5 // pred_region
        %s754 = ssub.s32 %s22, 2
        // Predicated region
        $region57: #{tpu_custom_call.1} parent=55 // pred_check
          %p755 = pneg %p135
        $region58: #{tpu_custom_call.1} parent=55 // pred_check_branch
          %757 = sbr.rel (%p755) target = $region60
        $region59: #{tpu_custom_call.1} parent=55 // pred_region
          %s758 = sand.u32 %s120, 1
          %s759 = scalar_lea.sflag [#allocation4], %s758
          %s760 = sand.u32 %s120, 1
          %s761 = smul.addr %s760, 32
          %s762 = scalar_lea.vmem [#allocation7], %s761
          %763 = dma.done %s759, 512
        $region60: #{tpu_custom_call.1} parent=55 // pred_fallthru
          _
        // Predicated region
        $region61: #{tpu_custom_call.1} parent=55 // pred_check
          %p764 = pneg %p163
        $region62: #{tpu_custom_call.1} parent=55 // pred_check_branch
          %766 = sbr.rel (%p764) target = $region64
        $region63: #{tpu_custom_call.1} parent=55 // pred_region
          %s767 = sand.u32 %s28, 1
          %s768 = scalar_lea.sflag [#allocation9], %s767
          %s769 = sand.u32 %s148, 1
          %s770 = smul.addr %s769, 32
          %s771 = scalar_lea.vmem [#allocation8], %s770
          %772 = dma.done %s768, 512
        $region64: #{tpu_custom_call.1} parent=55 // pred_fallthru
          _
        // Predicated region
        $region65: #{tpu_custom_call.1} parent=55 // pred_check
          %p773 = pneg %p191
        $region66: #{tpu_custom_call.1} parent=55 // pred_check_branch
          %775 = sbr.rel (%p773) target = $region68
        $region67: #{tpu_custom_call.1} parent=55 // pred_region
          %s776 = sand.u32 %s28, 1
          %s777 = scalar_lea.sflag [#allocation9], %s776
          %s778 = sand.u32 %s176, 1
          %s779 = smul.addr %s778, 32
          %s780 = scalar_lea.vmem [#allocation10], %s779
          %781 = dma.done %s777, 512
        $region68: #{tpu_custom_call.1} parent=55 // pred_fallthru
          _
      $region56: #{tpu_custom_call.1} parent=5 // pred_fallthru
        _
    $region6: #{tpu_custom_call.1} parent=1 // loop_footer
      %s26 = sadd.s32 1, %s22
    $region7: #{tpu_custom_call.1} parent=1 // loop_footer_branch
      %21 = sbr.rel target = $region3
    $region8: #{tpu_custom_call.1} parent=1 // loop_exit
      _
    %782 = vsyncpa [#allocation3], 1
    %s783 = scalar_lea.sflag [#allocation3], 1
    %784 = vsyncpa %s783, 1
    %785 = vsyncpa [#allocation6], 1
    %786 = vsyncpa [#allocation4], 1
    %s787 = scalar_lea.sflag [#allocation4], 1
    %788 = vsyncpa %s787, 1
    %789 = vsyncpa [#allocation9], 1
    %s790 = scalar_lea.sflag [#allocation9], 1
    %791 = vsyncpa %s790, 1

</llo_original>
